<compile_context>
chip_gen: v5e
topology: v5e:2x2
jax: 0.10.0
libtpu: 0.0.40
codegen_flags: <defaults>
</compile_context>

<pallas_src>
import functools

import jax
import jax.numpy as jnp
from jax.experimental import pallas as pl
from jax.experimental.pallas import tpu as pltpu


# ---------------------------------------------------------------------------
# Kernels
# ---------------------------------------------------------------------------

def _ca_fused_kernel(x_ref, w1_ref, b1_ref, w2_ref, b2_ref, o_ref, *, inv_hw):
    """Single-pass CALayer for one sample: global-avg-pool + MLP + scale.

    x_ref: (1, C, HW)   w1_ref: (mid_p, C)  b1_ref: (mid_p, 1)
    w2_ref: (C, mid_p)  b2_ref: (C, 1)      o_ref: (1, C, HW)
    """
    # Pooling reduction: index x_ref here and again below (do NOT bind the slab
    # to one value spanning both uses -- that live range can force Mosaic to
    # materialize a second full-slab VMEM copy).
    mean = jnp.sum(x_ref[0].astype(jnp.float32), axis=-1,
                   keepdims=True) * inv_hw                      # (C, 1)
    h = jnp.dot(w1_ref[...], mean,
                preferred_element_type=jnp.float32) + b1_ref[...]
    h = jnp.maximum(h, 0.0)                                     # (mid_p, 1)
    a = jnp.dot(w2_ref[...], h,
                preferred_element_type=jnp.float32) + b2_ref[...]
    a = jax.nn.sigmoid(a)                                       # (C, 1) f32
    # Fresh read of x_ref; multiply in f32, single downcast on store.
    o_ref[...] = (x_ref[...].astype(jnp.float32) * a[None]).astype(o_ref.dtype)


def _ca_attn_kernel(x_ref, w1_ref, b1_ref, w2_ref, b2_ref, a_ref, acc_ref, *,
                    inv_hw, hw, t_hw, mask_last):
    """Pass 1: spatial sum over HW tiles + tiny channel MLP -> attention.

    x_ref: (1, C, t_hw)   a_ref: (1, C, 1) f32   acc_ref: (C, 1) f32 scratch
    """
    j = pl.program_id(1)

    @pl.when(j == 0)
    def _():
        acc_ref[...] = jnp.zeros_like(acc_ref)

    x = x_ref[0].astype(jnp.float32)                            # (C, t_hw)
    if mask_last:
        # cdiv grid: zero out the out-of-range lanes of the partial last tile.
        col = j * t_hw + jax.lax.broadcasted_iota(jnp.int32, x.shape, 1)
        x = jnp.where(col < hw, x, 0.0)
    acc_ref[...] += jnp.sum(x, axis=-1, keepdims=True)          # (C, 1)

    @pl.when(j == pl.num_programs(1) - 1)
    def _():
        mean = acc_ref[...] * inv_hw                            # (C, 1)
        h = jnp.dot(w1_ref[...], mean,
                    preferred_element_type=jnp.float32) + b1_ref[...]
        h = jnp.maximum(h, 0.0)                                 # (mid_p, 1)
        a = jnp.dot(w2_ref[...], h,
                    preferred_element_type=jnp.float32) + b2_ref[...]
        a_ref[...] = jax.nn.sigmoid(a)[None]                    # (1, C, 1) f32


def _ca_scale_kernel(x_ref, a_ref, o_ref):
    """Pass 2: out = x * attention, broadcast over the spatial (lane) axis."""
    o_ref[...] = (x_ref[...].astype(jnp.float32) * a_ref[...]).astype(o_ref.dtype)


# ---------------------------------------------------------------------------
# Wrapper
# ---------------------------------------------------------------------------

def _vmem_capacity_bytes():
    try:
        return int(pltpu.get_tpu_info().vmem_capacity_bytes)
    except Exception:
        return 64 << 20     # conservative assumption (v7x per-TensorCore VMEM)


def _pick_t_hw(hw, c, itemsize, target_bytes):
    """Largest multiple-of-128 spatial tile with C * t_hw * itemsize <= target."""
    cap = max(128, (target_bytes // (c * itemsize)) // 128 * 128)
    hw_pad = ((hw + 127) // 128) * 128
    return min(cap, hw_pad)


def ca_layer(x_nchw, w1, b1, w2, b2, *,
             fused_cap_bytes=None, tile_target_bytes=None):
    """CALayer forward.

    x_nchw: (N, C, H, W)
    w1: (mid, C) = conv1.weight[:, :, 0, 0]   b1: (mid,) = conv1.bias
    w2: (C, mid) = conv2.weight[:, :, 0, 0]   b2: (C,)   = conv2.bias
    """
    N, C, H, W = x_nchw.shape
    mid = w1.shape[0]
    HW = H * W
    inv_hw = 1.0 / HW
    itemsize = x_nchw.dtype.itemsize

    x3d = x_nchw.reshape(N, C, HW)          # free reshape, native NCHW layout

    # Zero-pad the tiny "mid" dim up to a multiple of 8 (exactly equivalent math:
    # padded rows give relu(0)=0 and the matching w2 columns are zero).
    mid_p = max(8, ((mid + 7) // 8) * 8)
    w1p = jnp.zeros((mid_p, C), jnp.float32).at[:mid].set(w1.astype(jnp.float32))
    b1p = jnp.zeros((mid_p, 1), jnp.float32).at[:mid, 0].set(b1.astype(jnp.float32))
    w2p = jnp.zeros((C, mid_p), jnp.float32).at[:, :mid].set(w2.astype(jnp.float32))
    b2c = b2.reshape(C, 1).astype(jnp.float32)

    # Chip-aware policy: 128-MiB-VMEM chips (v5e/v6e, 1 TC/chip) vs 64-MiB-per-TC
    # chips (v7x-class, 2 TC/chip). Budgets leave room for ~4x (double-buffered
    # in + out) plus the tiny MLP params and internal scratch.
    vmem_phys = _vmem_capacity_bytes()
    if vmem_phys >= (100 << 20):
        default_fused_cap, default_tile, vmem_limit, n_cores = (
            24 << 20, 8 << 20, 104 << 20, 1)
    else:
        default_fused_cap, default_tile, vmem_limit, n_cores = (
            12 << 20, 6 << 20, 52 << 20, 2)
    fused_cap = default_fused_cap if fused_cap_bytes is None else fused_cap_bytes
    tile_target = default_tile if tile_target_bytes is None else tile_target_bytes

    slab_bytes = C * HW * itemsize
    t_hw = _pick_t_hw(HW, C, itemsize, tile_target)
    T = -(-HW // t_hw)

    use_fused = slab_bytes <= fused_cap
    # Megacore: with only one sample the fused grid has a single parallel point;
    # on 2-TC chips prefer the two-pass path whose spatial axis feeds both cores.
    if use_fused and n_cores >= 2 and N < n_cores and T >= 2:
        use_fused = False

    if use_fused:
        # ---- Fused single pass: whole (C, HW) sample slab per grid step. ----
        out3d = pl.pallas_call(
            functools.partial(_ca_fused_kernel, inv_hw=inv_hw),
            out_shape=jax.ShapeDtypeStruct((N, C, HW), x3d.dtype),
            grid_spec=pltpu.PrefetchScalarGridSpec(
                num_scalar_prefetch=0,
                grid=(N,),
                in_specs=[
                    pl.BlockSpec((1, C, HW), lambda n: (n, 0, 0)),
                    pl.BlockSpec((mid_p, C), lambda n: (0, 0)),
                    pl.BlockSpec((mid_p, 1), lambda n: (0, 0)),
                    pl.BlockSpec((C, mid_p), lambda n: (0, 0)),
                    pl.BlockSpec((C, 1), lambda n: (0, 0)),
                ],
                out_specs=pl.BlockSpec((1, C, HW), lambda n: (n, 0, 0)),
            ),
            compiler_params=pltpu.CompilerParams(
                dimension_semantics=("parallel",),
                vmem_limit_bytes=vmem_limit),
        )(x3d, w1p, b1p, w2p, b2c)
        return out3d.reshape(N, C, H, W)

    # ---- General two-pass path: lane-dense spatial tiles on a cdiv grid. ----
    if T == 1:
        # TODO(synk): tile the channel axis for the pathological case of a huge
        # C with tiny HW; for now use a single full-extent (legal) block.
        t_hw = HW
    mask_last = (HW % t_hw) != 0

    attn = pl.pallas_call(
        functools.partial(_ca_attn_kernel, inv_hw=inv_hw, hw=HW, t_hw=t_hw,
                          mask_last=mask_last),
        out_shape=jax.ShapeDtypeStruct((N, C, 1), jnp.float32),
        grid_spec=pltpu.PrefetchScalarGridSpec(
            num_scalar_prefetch=0,
            grid=(N, T),
            in_specs=[
                pl.BlockSpec((1, C, t_hw), lambda n, j: (n, 0, j)),
                pl.BlockSpec((mid_p, C), lambda n, j: (0, 0)),
                pl.BlockSpec((mid_p, 1), lambda n, j: (0, 0)),
                pl.BlockSpec((C, mid_p), lambda n, j: (0, 0)),
                pl.BlockSpec((C, 1), lambda n, j: (0, 0)),
            ],
            out_specs=pl.BlockSpec((1, C, 1), lambda n, j: (n, 0, 0)),
            scratch_shapes=[pltpu.VMEM((C, 1), jnp.float32)],
        ),
        compiler_params=pltpu.CompilerParams(
            dimension_semantics=("parallel", "arbitrary"),
            vmem_limit_bytes=vmem_limit),
    )(x3d, w1p, b1p, w2p, b2c)

    out3d = pl.pallas_call(
        _ca_scale_kernel,
        out_shape=jax.ShapeDtypeStruct((N, C, HW), x3d.dtype),
        grid_spec=pltpu.PrefetchScalarGridSpec(
            num_scalar_prefetch=0,
            grid=(N, T),
            in_specs=[
                pl.BlockSpec((1, C, t_hw), lambda n, j: (n, 0, j)),
                pl.BlockSpec((1, C, 1), lambda n, j: (n, 0, 0)),
            ],
            out_specs=pl.BlockSpec((1, C, t_hw), lambda n, j: (n, 0, j)),
        ),
        compiler_params=pltpu.CompilerParams(
            dimension_semantics=("parallel", "parallel"),
            vmem_limit_bytes=vmem_limit),
    )(x3d, attn)

    return out3d.reshape(N, C, H, W)


def ca_layer_ref(x_nchw, w1, b1, w2, b2):
    """Pure-JAX reference (same math, NCHW)."""
    xf = x_nchw.astype(jnp.float32)
    y = jnp.mean(xf, axis=(2, 3))                               # (N, C)
    h = jnp.maximum(y @ w1.T + b1[None, :], 0.0)                # (N, mid)
    a = jax.nn.sigmoid(h @ w2.T + b2[None, :])                  # (N, C)
    return (xf * a[:, :, None, None]).astype(x_nchw.dtype)


if __name__ == "__main__":
    key = jax.random.PRNGKey(0)
    k_x, k_w1, k_b1, k_w2, k_b2, k_x2 = jax.random.split(key, 6)

    # Small shapes consistent with the module: channel must be divisible by 8.
    N, C, H, W = 2, 16, 16, 16
    mid = C // 8

    x = jax.random.normal(k_x, (N, C, H, W), dtype=jnp.float32)

    # Conv2d 1x1 weights in matmul form:
    #   conv1.weight (mid, C, 1, 1) -> w1 (mid, C); conv1.bias -> b1 (mid,)
    #   conv2.weight (C, mid, 1, 1) -> w2 (C, mid); conv2.bias -> b2 (C,)
    w1 = jax.random.normal(k_w1, (mid, C), dtype=jnp.float32) * 0.1
    b1 = jax.random.normal(k_b1, (mid,), dtype=jnp.float32) * 0.1
    w2 = jax.random.normal(k_w2, (C, mid), dtype=jnp.float32) * 0.1
    b2 = jax.random.normal(k_b2, (C,), dtype=jnp.float32) * 0.1

    ref = ca_layer_ref(x, w1, b1, w2, b2)

    # Path 1: fused single-pass kernel (whole sample slab fits the VMEM budget).
    out = jax.block_until_ready(ca_layer(x, w1, b1, w2, b2))
    assert out.shape == (N, C, H, W)
    assert jnp.allclose(out, ref, atol=1e-5, rtol=1e-5), "fused path mismatch"

    # Path 2: two-pass tiled kernels (force tiny caps to exercise that path).
    out_tiled = jax.block_until_ready(
        ca_layer(x, w1, b1, w2, b2,
                 fused_cap_bytes=1024, tile_target_bytes=C * 128 * 4))
    assert jnp.allclose(out_tiled, ref, atol=1e-5, rtol=1e-5), "tiled path mismatch"

    # Path 3: ragged spatial extent (H*W not a multiple of 128) on the tiled
    # path -> exercises the cdiv grid with a masked partial last tile.
    Hr, Wr = 16, 12                                             # HW = 192
    xr = jax.random.normal(k_x2, (N, C, Hr, Wr), dtype=jnp.float32)
    ref_r = ca_layer_ref(xr, w1, b1, w2, b2)
    out_r = jax.block_until_ready(
        ca_layer(xr, w1, b1, w2, b2,
                 fused_cap_bytes=1024, tile_target_bytes=C * 128 * 4))
    assert jnp.allclose(out_r, ref_r, atol=1e-5, rtol=1e-5), "masked path mismatch"

    print("KERNEL_OK")
</pallas_src>

<mosaic_0001>
module attributes {stable_mosaic.version = 11 : i64} {
  func.func @_ca_fused_kernel(%arg0: i32, %arg1: memref<1x16x256xf32, #tpu.memory_space<vmem>>, %arg2: memref<8x16xf32, #tpu.memory_space<vmem>>, %arg3: memref<8x1xf32, #tpu.memory_space<vmem>>, %arg4: memref<16x8xf32, #tpu.memory_space<vmem>>, %arg5: memref<16x1xf32, #tpu.memory_space<vmem>>, %arg6: memref<1x16x256xf32, #tpu.memory_space<vmem>>) attributes {dimension_semantics = [#tpu.dimension_semantics<parallel>], iteration_bounds = array<i64: 2>, scalar_prefetch = 0 : i64, scratch_operands = 0 : i64, tpu.core_type = #tpu.core_type<tc>, window_params = [{transform_indices = @transform_0, window_bounds = array<i64: 1, 16, 256>}, {pipeline_mode = #tpu.pipeline_mode<synchronous>, transform_indices = @transform_1, window_bounds = array<i64: 8, 16>}, {pipeline_mode = #tpu.pipeline_mode<synchronous>, transform_indices = @transform_2, window_bounds = array<i64: 8, 1>}, {pipeline_mode = #tpu.pipeline_mode<synchronous>, transform_indices = @transform_3, window_bounds = array<i64: 16, 8>}, {pipeline_mode = #tpu.pipeline_mode<synchronous>, transform_indices = @transform_4, window_bounds = array<i64: 16, 1>}, {transform_indices = @transform_5, window_bounds = array<i64: 1, 16, 256>}]} {
    %c0 = arith.constant 0 : index
    %c0_0 = arith.constant 0 : index
    %c0_1 = arith.constant 0 : index
    %0 = vector.load %arg1[%c0, %c0_0, %c0_1] : memref<1x16x256xf32, #tpu.memory_space<vmem>>, vector<1x16x256xf32>
    %1 = vector.shape_cast %0 : vector<1x16x256xf32> to vector<16x256xf32>
    %cst = arith.constant dense<0.000000e+00> : vector<16xf32>
    %2 = vector.multi_reduction <add>, %1, %cst [1] : vector<16x256xf32> to vector<16xf32>
    %3 = vector.shape_cast %2 : vector<16xf32> to vector<16x1xf32>
    %cst_2 = arith.constant 3.906250e-03 : f32
    %4 = vector.broadcast %cst_2 : f32 to vector<16x1xf32>
    %5 = arith.mulf %3, %4 : vector<16x1xf32>
    %c0_3 = arith.constant 0 : index
    %c0_4 = arith.constant 0 : index
    %6 = vector.load %arg2[%c0_3, %c0_4] : memref<8x16xf32, #tpu.memory_space<vmem>>, vector<8x16xf32>
    %cst_5 = arith.constant dense<0.000000e+00> : vector<8x1xf32>
    %7 = tpu.matmul %6, %5, %cst_5 {dimension_numbers = #tpu.dot_dimension_numbers<[1], [0], [0], [1], [0, 0, 1, 1], [], []>} : vector<8x16xf32>, vector<16x1xf32>, vector<8x1xf32> -> vector<8x1xf32>
    %c0_6 = arith.constant 0 : index
    %c0_7 = arith.constant 0 : index
    %8 = vector.load %arg3[%c0_6, %c0_7] : memref<8x1xf32, #tpu.memory_space<vmem>>, vector<8x1xf32>
    %9 = arith.addf %7, %8 : vector<8x1xf32>
    %cst_8 = arith.constant 0.000000e+00 : f32
    %10 = vector.broadcast %cst_8 : f32 to vector<8x1xf32>
    %11 = arith.maximumf %9, %10 : vector<8x1xf32>
    %c0_9 = arith.constant 0 : index
    %c0_10 = arith.constant 0 : index
    %12 = vector.load %arg4[%c0_9, %c0_10] : memref<16x8xf32, #tpu.memory_space<vmem>>, vector<16x8xf32>
    %cst_11 = arith.constant dense<0.000000e+00> : vector<16x1xf32>
    %13 = tpu.matmul %12, %11, %cst_11 {dimension_numbers = #tpu.dot_dimension_numbers<[1], [0], [0], [1], [0, 0, 1, 1], [], []>} : vector<16x8xf32>, vector<8x1xf32>, vector<16x1xf32> -> vector<16x1xf32>
    %c0_12 = arith.constant 0 : index
    %c0_13 = arith.constant 0 : index
    %14 = vector.load %arg5[%c0_12, %c0_13] : memref<16x1xf32, #tpu.memory_space<vmem>>, vector<16x1xf32>
    %15 = arith.addf %13, %14 : vector<16x1xf32>
    %16 = arith.negf %15 : vector<16x1xf32>
    %17 = math.exp %16 : vector<16x1xf32>
    %cst_14 = arith.constant 1.000000e+00 : f32
    %18 = vector.broadcast %cst_14 : f32 to vector<16x1xf32>
    %19 = arith.addf %18, %17 : vector<16x1xf32>
    %20 = arith.divf %18, %19 : vector<16x1xf32>
    %c0_15 = arith.constant 0 : index
    %c0_16 = arith.constant 0 : index
    %c0_17 = arith.constant 0 : index
    %21 = vector.load %arg1[%c0_15, %c0_16, %c0_17] : memref<1x16x256xf32, #tpu.memory_space<vmem>>, vector<1x16x256xf32>
    %22 = vector.shape_cast %20 : vector<16x1xf32> to vector<1x16x1xf32>
    %23 = vector.broadcast %22 : vector<1x16x1xf32> to vector<1x16x256xf32>
    %24 = arith.mulf %21, %23 : vector<1x16x256xf32>
    %c0_18 = arith.constant 0 : index
    %c0_19 = arith.constant 0 : index
    %c0_20 = arith.constant 0 : index
    %25 = vector.load %arg6[%c0_18, %c0_19, %c0_20] : memref<1x16x256xf32, #tpu.memory_space<vmem>>, vector<1x16x256xf32>
    tpu.vector_store %arg6[%c0_18, %c0_19, %c0_20], %24 {strides = array<i32>} : memref<1x16x256xf32, #tpu.memory_space<vmem>>, vector<1x16x256xf32>,
    return
  }
  func.func @transform_0(%arg0: i32) -> (i32, i32, i32) {
    %c0_i32 = arith.constant 0 : i32
    %c0_i32_0 = arith.constant 0 : i32
    %c0_i32_1 = arith.constant 0 : i32
    return %arg0, %c0_i32, %c0_i32_0 : i32, i32, i32
  }
  func.func @transform_1(%arg0: i32) -> (i32, i32) {
    %c0_i32 = arith.constant 0 : i32
    %c0_i32_0 = arith.constant 0 : i32
    %c0_i32_1 = arith.constant 0 : i32
    return %c0_i32, %c0_i32_0 : i32, i32
  }
  func.func @transform_2(%arg0: i32) -> (i32, i32) {
    %c0_i32 = arith.constant 0 : i32
    %c0_i32_0 = arith.constant 0 : i32
    %c0_i32_1 = arith.constant 0 : i32
    return %c0_i32, %c0_i32_0 : i32, i32
  }
  func.func @transform_3(%arg0: i32) -> (i32, i32) {
    %c0_i32 = arith.constant 0 : i32
    %c0_i32_0 = arith.constant 0 : i32
    %c0_i32_1 = arith.constant 0 : i32
    return %c0_i32, %c0_i32_0 : i32, i32
  }
  func.func @transform_4(%arg0: i32) -> (i32, i32) {
    %c0_i32 = arith.constant 0 : i32
    %c0_i32_0 = arith.constant 0 : i32
    %c0_i32_1 = arith.constant 0 : i32
    return %c0_i32, %c0_i32_0 : i32, i32
  }
  func.func @transform_5(%arg0: i32) -> (i32, i32, i32) {
    %c0_i32 = arith.constant 0 : i32
    %c0_i32_0 = arith.constant 0 : i32
    %c0_i32_1 = arith.constant 0 : i32
    return %arg0, %c0_i32, %c0_i32_0 : i32, i32, i32
  }
}

</mosaic_0001>

<llo_original>
// kernel: tpu_custom_call.1
$region0: #{tpu_custom_call.1}
  #allocation0 [shape = 'u32[]', space=smem, size = 0x4, offset = 0x4, fixed_abs, tag = 'smem constant byte address 0x4 - core index']
  #allocation1 [shape = 'u32[72,128]{1,0:T(1,128)}', space=vmem, size = 0x9000, scoped, tag = 'internal scratch']
  %s0 = inlined_call_operand.hbm [shape: f32[2,16,256], index: 0, kind: input, shape index: {}]
  %s1 = inlined_call_operand.vmem [shape: f32[8,16], index: 1, kind: input, shape index: {}]
  %s2 = inlined_call_operand.vmem [shape: f32[8,1], index: 2, kind: input, shape index: {}]
  %s3 = inlined_call_operand.vmem [shape: f32[16,8], index: 3, kind: input, shape index: {}]
  %s4 = inlined_call_operand.vmem [shape: f32[16,1], index: 4, kind: input, shape index: {}]
  %s5 = inlined_call_operand.hbm [shape: f32[2,16,256], index: 5, kind: output, shape index: {}]
  %s6 = sld [smem:[#allocation0]]
  $region57: #{tpu_custom_call.1} parent=0
    _
  %s8 = ssub.s32 1, %s6
  %s9 = scalar_select 0, %s8, %s6
  $region1: #{tpu_custom_call.1} parent=0
    #allocation2 [shape = 'u8[32768]{0}', space=vmem, size = 0x8000, scoped, tag = 'input window, operand 0']
    #allocation3 [shape = 's32[2]{0}', space=sflag, size = 0x8, scoped, tag = 'scoped memory for tpu_custom_call.1']
    #allocation4 [shape = 's32[2]{0}', space=sflag, size = 0x8, scoped, tag = 'scoped memory for tpu_custom_call.1']
    #allocation5 [shape = 'u8[32768]{0}', space=vmem, size = 0x8000, scoped, tag = 'output window, operand 0']
    %10 = vsyncpa [#allocation3], 0
    %s11 = scalar_lea.sflag [#allocation3], 1
    %12 = vsyncpa %s11, 0
    %13 = vsyncpa [#allocation4], 0
    %s14 = scalar_lea.sflag [#allocation4], 1
    %15 = vsyncpa %s14, 0
    loop: start=0, step=1, limit=4
    $region2: #{tpu_custom_call.1} parent=1 // loop_pre_header
      _
    $region3: #{tpu_custom_call.1} parent=1 // loop_header
      %s17 = sphi 0, %s21
      %p18 = scmp.ge.s32.totalorder %s17, 4
      %s27 = sphi 0, %s29
      %s30 = sphi 0, %s27
      %s31 = sphi 0, %s30
      %s47 = sphi 0, %s31
      %s51 = sphi 0, %s51
      %s53 = sphi 0, %s51
      %s54 = sphi 0, %s53
      %s68 = sphi 0, %s54
      %s72 = sphi 0, %s72
      %s74 = sphi 0, %s72
      %s75 = sphi 0, %s74
      %s89 = sphi 0, %s75
      %s93 = sphi 0, %s93
      %s95 = sphi 0, %s93
      %s96 = sphi 0, %s95
      %s110 = sphi 0, %s96
      %s114 = sphi 0, %s114
      %s116 = sphi 0, %s114
      %s117 = sphi 0, %s116
      %s131 = sphi 0, %s117
      %s137 = sphi 0, %s139
      %s140 = sphi 0, %s137
      %s141 = sphi 0, %s140
      %s157 = sphi 0, %s141
    $region4: #{tpu_custom_call.1} parent=1 // loop_header_branch
      %20 = sbr.rel (%p18) target = $region8
    $region5: #{tpu_custom_call.1} parent=1 // loop_body
      %s22 = ssub.s32 %s17, 1
      %s23 = ssub.s32 %s17, 2
      %s24 = sadd.s32 %s17, 1
      %s25 = ssub.s32 %s17, %s24
      %p26 = scmp.eq.s32.totalorder %s25, 0
      %s28 = sadd.s32 %s27, 1
      %s29 = scalar_select %p26, %s27, %s28
      %p32 = pneg %p26
      %p33 = scmp.eq.s32.totalorder %s17, 1
      %p34 = por %p32, %p33
      %p35 = scmp.ne.s32.totalorder %s27, %s30
      %p36 = scmp.eq.s32.totalorder %s17, 0
      %p37 = por %p35, %p36
      %p38 = scmp.ne.s32.totalorder %s27, %s30
      %p39 = scmp.eq.s32.totalorder %s22, 1
      %p40 = por %p38, %p39
      %p41 = scmp.ne.s32.totalorder %s30, %s31
      %p42 = scmp.eq.s32.totalorder %s22, 0
      %p43 = por %p41, %p42
      %p44 = scmp.ne.s32.totalorder %s30, %s31
      %p45 = scmp.eq.s32.totalorder %s23, 1
      %p46 = por %p44, %p45
      %p48 = scmp.ne.s32.totalorder %s31, %s47
      %p49 = scmp.eq.s32.totalorder %s23, 0
      %p50 = por %p48, %p49
      %s52 = sadd.s32 %s51, 1
      %p55 = scmp.eq.s32.totalorder %s17, 1
      %p56 = scmp.ne.s32.totalorder %s51, %s53
      %p57 = scmp.eq.s32.totalorder %s17, 0
      %p58 = por %p56, %p57
      %p59 = scmp.ne.s32.totalorder %s51, %s53
      %p60 = scmp.eq.s32.totalorder %s22, 1
      %p61 = por %p59, %p60
      %p62 = scmp.ne.s32.totalorder %s53, %s54
      %p63 = scmp.eq.s32.totalorder %s22, 0
      %p64 = por %p62, %p63
      %p65 = scmp.ne.s32.totalorder %s53, %s54
      %p66 = scmp.eq.s32.totalorder %s23, 1
      %p67 = por %p65, %p66
      %p69 = scmp.ne.s32.totalorder %s54, %s68
      %p70 = scmp.eq.s32.totalorder %s23, 0
      %p71 = por %p69, %p70
      %s73 = sadd.s32 %s72, 1
      %p76 = scmp.eq.s32.totalorder %s17, 1
      %p77 = scmp.ne.s32.totalorder %s72, %s74
      %p78 = scmp.eq.s32.totalorder %s17, 0
      %p79 = por %p77, %p78
      %p80 = scmp.ne.s32.totalorder %s72, %s74
      %p81 = scmp.eq.s32.totalorder %s22, 1
      %p82 = por %p80, %p81
      %p83 = scmp.ne.s32.totalorder %s74, %s75
      %p84 = scmp.eq.s32.totalorder %s22, 0
      %p85 = por %p83, %p84
      %p86 = scmp.ne.s32.totalorder %s74, %s75
      %p87 = scmp.eq.s32.totalorder %s23, 1
      %p88 = por %p86, %p87
      %p90 = scmp.ne.s32.totalorder %s75, %s89
      %p91 = scmp.eq.s32.totalorder %s23, 0
      %p92 = por %p90, %p91
      %s94 = sadd.s32 %s93, 1
      %p97 = scmp.eq.s32.totalorder %s17, 1
      %p98 = scmp.ne.s32.totalorder %s93, %s95
      %p99 = scmp.eq.s32.totalorder %s17, 0
      %p100 = por %p98, %p99
      %p101 = scmp.ne.s32.totalorder %s93, %s95
      %p102 = scmp.eq.s32.totalorder %s22, 1
      %p103 = por %p101, %p102
      %p104 = scmp.ne.s32.totalorder %s95, %s96
      %p105 = scmp.eq.s32.totalorder %s22, 0
      %p106 = por %p104, %p105
      %p107 = scmp.ne.s32.totalorder %s95, %s96
      %p108 = scmp.eq.s32.totalorder %s23, 1
      %p109 = por %p107, %p108
      %p111 = scmp.ne.s32.totalorder %s96, %s110
      %p112 = scmp.eq.s32.totalorder %s23, 0
      %p113 = por %p111, %p112
      %s115 = sadd.s32 %s114, 1
      %p118 = scmp.eq.s32.totalorder %s17, 1
      %p119 = scmp.ne.s32.totalorder %s114, %s116
      %p120 = scmp.eq.s32.totalorder %s17, 0
      %p121 = por %p119, %p120
      %p122 = scmp.ne.s32.totalorder %s114, %s116
      %p123 = scmp.eq.s32.totalorder %s22, 1
      %p124 = por %p122, %p123
      %p125 = scmp.ne.s32.totalorder %s116, %s117
      %p126 = scmp.eq.s32.totalorder %s22, 0
      %p127 = por %p125, %p126
      %p128 = scmp.ne.s32.totalorder %s116, %s117
      %p129 = scmp.eq.s32.totalorder %s23, 1
      %p130 = por %p128, %p129
      %p132 = scmp.ne.s32.totalorder %s117, %s131
      %p133 = scmp.eq.s32.totalorder %s23, 0
      %p134 = por %p132, %p133
      %s135 = ssub.s32 %s17, %s24
      %p136 = scmp.eq.s32.totalorder %s135, 0
      %s138 = sadd.s32 %s137, 1
      %s139 = scalar_select %p136, %s137, %s138
      %p142 = pneg %p136
      %p143 = scmp.eq.s32.totalorder %s17, 1
      %p144 = por %p142, %p143
      %p145 = scmp.ne.s32.totalorder %s137, %s140
      %p146 = scmp.eq.s32.totalorder %s17, 0
      %p147 = por %p145, %p146
      %p148 = scmp.ne.s32.totalorder %s137, %s140
      %p149 = scmp.eq.s32.totalorder %s22, 1
      %p150 = por %p148, %p149
      %p151 = scmp.ne.s32.totalorder %s140, %s141
      %p152 = scmp.eq.s32.totalorder %s22, 0
      %p153 = por %p151, %p152
      %p154 = scmp.ne.s32.totalorder %s140, %s141
      %p155 = scmp.eq.s32.totalorder %s23, 1
      %p156 = por %p154, %p155
      %p158 = scmp.ne.s32.totalorder %s141, %s157
      %p159 = scmp.eq.s32.totalorder %s23, 0
      %p160 = por %p158, %p159
      %p161 = scmp.le.s32.totalorder 1, %s17
      %p162 = scmp.lt.s32.totalorder %s17, 3
      %p163 = pnand %p161, %p162
      %p164 = pneg %p163
      // Predicated region
      $region9: #{tpu_custom_call.1} parent=5 // pred_check
        _
      $region10: #{tpu_custom_call.1} parent=5 // pred_check_branch
        %166 = sbr.rel (%p163) target = $region12
      $region11: #{tpu_custom_call.1} parent=5 // pred_region
        %s167 = ssub.s32 %s17, 1
        // Predicated region
        $region13: #{tpu_custom_call.1} parent=11 // pred_check
          %p168 = pneg %p64
        $region14: #{tpu_custom_call.1} parent=11 // pred_check_branch
          %170 = sbr.rel (%p168) target = $region16
        $region15: #{tpu_custom_call.1} parent=11 // pred_region
          _
        $region16: #{tpu_custom_call.1} parent=11 // pred_fallthru
          _
        // Predicated region
        $region17: #{tpu_custom_call.1} parent=11 // pred_check
          %p171 = pneg %p85
        $region18: #{tpu_custom_call.1} parent=11 // pred_check_branch
          %173 = sbr.rel (%p171) target = $region20
        $region19: #{tpu_custom_call.1} parent=11 // pred_region
          _
        $region20: #{tpu_custom_call.1} parent=11 // pred_fallthru
          _
        // Predicated region
        $region21: #{tpu_custom_call.1} parent=11 // pred_check
          %p174 = pneg %p106
        $region22: #{tpu_custom_call.1} parent=11 // pred_check_branch
          %176 = sbr.rel (%p174) target = $region24
        $region23: #{tpu_custom_call.1} parent=11 // pred_region
          _
        $region24: #{tpu_custom_call.1} parent=11 // pred_fallthru
          _
        // Predicated region
        $region25: #{tpu_custom_call.1} parent=11 // pred_check
          %p177 = pneg %p127
        $region26: #{tpu_custom_call.1} parent=11 // pred_check_branch
          %179 = sbr.rel (%p177) target = $region28
        $region27: #{tpu_custom_call.1} parent=11 // pred_region
          _
        $region28: #{tpu_custom_call.1} parent=11 // pred_fallthru
          _
      $region12: #{tpu_custom_call.1} parent=5 // pred_fallthru
        _
      %p180 = scmp.lt.s32.totalorder %s17, 2
      // Predicated region
      $region29: #{tpu_custom_call.1} parent=5 // pred_check
        %p181 = pneg %p180
      $region30: #{tpu_custom_call.1} parent=5 // pred_check_branch
        %183 = sbr.rel (%p181) target = $region32
      $region31: #{tpu_custom_call.1} parent=5 // pred_region
        // Predicated region
        $region33: #{tpu_custom_call.1} parent=31 // pred_check
          %p184 = pneg %p37
        $region34: #{tpu_custom_call.1} parent=31 // pred_check_branch
          %186 = sbr.rel (%p184) target = $region36
        $region35: #{tpu_custom_call.1} parent=31 // pred_region
          %s187 = sand.u32 %s27, 1
          %s188 = scalar_lea.sflag [#allocation3], %s187
          %s189 = sand.u32 %s27, 1
          %s190 = smul.addr %s189, 32
          %s191 = scalar_lea.vmem [#allocation2], %s190
          %193 = vsyncadd %s188, 0
          %s194 = smul.addr %s17, 4
          %s195 = smul.addr %s194, 8
          %s196 = scalar_lea.hbm %s0, %s195
          %s197 = sshll.u32 %s196, 4
          %s198 = int_to_ptr.hbm [resolvable:$true] %s197
          %s199 = sshll.u32 %s191, 4
          %s200 = int_to_ptr.vmem [resolvable:$true] %s199
          %205 = dma.hbm_to_vmem [thread:$0]  %s198, 512, %s200, %s188, 256, 256, 16
        $region36: #{tpu_custom_call.1} parent=31 // pred_fallthru
          _
      $region32: #{tpu_custom_call.1} parent=5 // pred_fallthru
        _
      %p206 = scmp.le.s32.totalorder 1, %s17
      %p207 = scmp.lt.s32.totalorder %s17, 3
      %p208 = pnand %p206, %p207
      %p209 = pneg %p208
      // Predicated region
      $region37: #{tpu_custom_call.1} parent=5 // pred_check
        _
      $region38: #{tpu_custom_call.1} parent=5 // pred_check_branch
        %211 = sbr.rel (%p208) target = $region40
      $region39: #{tpu_custom_call.1} parent=5 // pred_region
        %s212 = ssub.s32 %s17, 1
        %s213 = sand.u32 %s30, 1
        %s214 = scalar_lea.sflag [#allocation3], %s213
        %s215 = sand.u32 %s30, 1
        %s216 = smul.addr %s215, 32
        %s217 = scalar_lea.vmem [#allocation2], %s216
        // Predicated region
        $region41: #{tpu_custom_call.1} parent=39 // pred_check
          %p218 = pneg %p43
        $region42: #{tpu_custom_call.1} parent=39 // pred_check_branch
          %220 = sbr.rel (%p218) target = $region44
        $region43: #{tpu_custom_call.1} parent=39 // pred_region
          %222 = dma.done %s214, 512
        $region44: #{tpu_custom_call.1} parent=39 // pred_fallthru
          _
        %s223 = sand.u32 %s30, 1
        %s224 = scalar_lea.sflag [#allocation3], %s223
        %s225 = sand.u32 %s30, 1
        %s226 = smul.addr %s225, 32
        %s227 = scalar_lea.vmem [#allocation2], %s226
        %p228 = pneg %p43
        %p229 = pneg %p40
        %p230 = pneg %p64
        %p231 = pneg %p61
        %p232 = pneg %p85
        %p233 = pneg %p82
        %p234 = pneg %p106
        %p235 = pneg %p103
        %p236 = pneg %p127
        %p237 = pneg %p124
        %p238 = pneg %p153
        %p239 = pneg %p150
        %s240 = sand.u32 %s140, 1
        %s241 = scalar_lea.sflag [#allocation4], %s240
        %s242 = sand.u32 %s140, 1
        %s243 = smul.addr %s242, 32
        %s244 = scalar_lea.vmem [#allocation5], %s243
        %v245 = vld [vmem:[%s217] sm:$0xff]
        %v246 = vld [vmem:[%s217 + $0x8] sm:$0xff]
        %v247 = vld [vmem:[%s217 + $0x10] sm:$0xff]
        %v248 = vld [vmem:[%s217 + $0x18] sm:$0xff]
        %v249 = vadd.f32 %v245, %v246
        %250 = vadd.xlane.f32.xlu0 %v249
        %v251 = vpop.xlane.xlu0 %250
        %v252 = vadd.f32 %v247, %v248
        %253 = vadd.xlane.f32.xlu0 %v252
        %v254 = vpop.xlane.xlu0 %253
        %v255 = vmul.f32 %v251, 0.00390625
        %v256 = vmul.f32 %v254, 0.00390625
        %v257 = vld [vmem:[%s1] sm:$0xff]
        %v258 = vld [vmem:[%s2] sm:$0xff]
        %vm259 = vcmask 130048
        %v261 = vsel %vm259, %v257, 0
        %263 = vmatpush.msra.mxu0 0.0
        %264 = vmatpush.msra.mxu0 0.0
        %265 = vmatpush.msra.mxu0 0.0
        %266 = vmatpush.msra.mxu0 0.0
        %267 = vmatpush.msra.mxu0 0.0
        %268 = vmatpush.msra.mxu0 0.0
        %269 = vmatpush.msra.mxu0 0.0
        %270 = vmatpush.msra.mxu0 0.0
        %271 = vmatpush.msra.mxu0 0.0
        %272 = vmatpush.msra.mxu0 0.0
        %273 = vmatpush.msra.mxu0 0.0
        %274 = vmatpush.msra.mxu0 0.0
        %275 = vmatpush.msra.mxu0 0.0
        %276 = vmatpush.msra.mxu0 0.0
        %277 = vmatpush.msra.mxu0 %v256
        %278 = vmatpush.msra.mxu0 %v255
        %279 = vmatmul.f32.gmra.mxu0 %v261
        %v280 = vpop.f32.mrf.mxu0
        %v281 = vadd.f32 %v258, %v280
        %282 = vdwg.mxu0
        %v283 = vmax.f32 %v281, 0.0
        %v284 = vld [vmem:[%s3] sm:$0xff]
        %v285 = vld [vmem:[%s3 + $0x8] sm:$0xff]
        %v286 = vld [vmem:[%s4] sm:$0xff]
        %v287 = vld [vmem:[%s4 + $0x8] sm:$0xff]
        %vm288 = vcmask 64512
        %v290 = vsel %vm288, %v284, 0
        %v293 = vsel %vm288, %v285, 0
        %295 = vmatpush.msra.mxu0 0.0
        %296 = vmatpush.msra.mxu0 0.0
        %297 = vmatpush.msra.mxu0 0.0
        %298 = vmatpush.msra.mxu0 0.0
        %299 = vmatpush.msra.mxu0 0.0
        %300 = vmatpush.msra.mxu0 0.0
        %301 = vmatpush.msra.mxu0 0.0
        %302 = vmatpush.msra.mxu0 0.0
        %303 = vmatpush.msra.mxu0 0.0
        %304 = vmatpush.msra.mxu0 0.0
        %305 = vmatpush.msra.mxu0 0.0
        %306 = vmatpush.msra.mxu0 0.0
        %307 = vmatpush.msra.mxu0 0.0
        %308 = vmatpush.msra.mxu0 0.0
        %309 = vmatpush.msra.mxu0 0.0
        %310 = vmatpush.msra.mxu0 %v283
        %311 = vmatmul.f32.gmra.mxu0 %v290
        %v312 = vpop.f32.mrf.mxu0
        %v313 = vadd.f32 %v286, %v312
        %314 = vmatmul.f32.gmra.mxu0 %v293
        %v315 = vpop.f32.mrf.mxu0
        %v316 = vadd.f32 %v287, %v315
        %317 = vdwg.mxu0
        %v318 = vxor.u32 %v313, 2147483648
        %v319 = vxor.u32 %v316, 2147483648
        %v320 = vmul.f32 %v318, 1.442695
        %v321 = vpow.pop %v320
        %v322 = vmul.f32 %v319, 1.442695
        %v323 = vpow.pop %v322
        %v324 = vadd.f32 %v321, 1.0
        %v325 = vadd.f32 %v323, 1.0
        %v326 = vrcp.pop %v324
        %v327 = vmul.f32 %v324, %v326
        %v328 = vsub.f32 1.0, %v327
        %v329 = vmul.f32 %v326, %v328
        %v330 = vadd.f32 %v326, %v329
        %vm331 = vweird.f32 %v324
        %vm332 = vweird.f32 %v326
        %vm333 = vmor %vm331, %vm332
        %v334 = vsel %vm333, %v326, %v330
        %v335 = vand.u32 2147483647, %v324
        %vm336 = vcmp.eq.f32.partialorder %v335, 8.507059e+37
        %v337 = vand.u32 %v324, 2147483648
        %v338 = vor.u32 1.1754944e-38, %v337
        %v339 = vsel %vm336, %v338, %v334
        %v340 = vmul.f32 1.0, %v339
        %v341 = vrcp.pop %v325
        %v342 = vmul.f32 %v325, %v341
        %v343 = vsub.f32 1.0, %v342
        %v344 = vmul.f32 %v341, %v343
        %v345 = vadd.f32 %v341, %v344
        %vm346 = vweird.f32 %v325
        %vm347 = vweird.f32 %v341
        %vm348 = vmor %vm346, %vm347
        %v349 = vsel %vm348, %v341, %v345
        %v350 = vand.u32 2147483647, %v325
        %vm351 = vcmp.eq.f32.partialorder %v350, 8.507059e+37
        %v352 = vand.u32 %v325, 2147483648
        %v353 = vor.u32 1.1754944e-38, %v352
        %v354 = vsel %vm351, %v353, %v349
        %v355 = vmul.f32 1.0, %v354
        %357 = vset.pattern.permute.xlu0 0
        %358 = vperm.xlu0 %357, %v340
        %v359 = vpop.permute.xlu0 %358
        %362 = vset.pattern.permute.xlu0 0
        %363 = vperm.xlu0 %362, %v355
        %v364 = vpop.permute.xlu0 %363
        %v366 = vmul.f32 %v245, %v359
        %v367 = vmul.f32 %v246, %v359
        %v368 = vmul.f32 %v247, %v364
        %v369 = vmul.f32 %v248, %v364
        %370 = vst [vmem:[%s244] sm:$0xff] %v366
        %371 = vst [vmem:[%s244 + $0x8] sm:$0xff] %v367
        %372 = vst [vmem:[%s244 + $0x10] sm:$0xff] %v368
        %373 = vst [vmem:[%s244 + $0x18] sm:$0xff] %v369
        %s374 = sand.u32 %s140, 1
        %s375 = scalar_lea.sflag [#allocation4], %s374
        %s376 = sand.u32 %s140, 1
        %s377 = smul.addr %s376, 32
        %s378 = scalar_lea.vmem [#allocation5], %s377
        // Predicated region
        $region45: #{tpu_custom_call.1} parent=39 // pred_check
          %p379 = pneg %p150
        $region46: #{tpu_custom_call.1} parent=39 // pred_check_branch
          %381 = sbr.rel (%p379) target = $region48
        $region47: #{tpu_custom_call.1} parent=39 // pred_region
          %383 = vsyncadd %s375, 0
          %s384 = smul.addr %s22, 4
          %s385 = smul.addr %s384, 8
          %s386 = scalar_lea.hbm %s5, %s385
          %s387 = sshll.u32 %s378, 4
          %s388 = int_to_ptr.vmem [resolvable:$true] %s387
          %s389 = sshll.u32 %s386, 4
          %s390 = int_to_ptr.hbm [resolvable:$true] %s389
          %395 = dma.vmem_to_hbm [thread:$0]  %s388, 512, %s390, %s375, 256, 256, 16
        $region48: #{tpu_custom_call.1} parent=39 // pred_fallthru
          _
      $region40: #{tpu_custom_call.1} parent=5 // pred_fallthru
        _
      %p396 = scmp.le.s32.totalorder 2, %s17
      // Predicated region
      $region49: #{tpu_custom_call.1} parent=5 // pred_check
        %p397 = pneg %p396
      $region50: #{tpu_custom_call.1} parent=5 // pred_check_branch
        %399 = sbr.rel (%p397) target = $region52
      $region51: #{tpu_custom_call.1} parent=5 // pred_region
        %s400 = ssub.s32 %s17, 2
        // Predicated region
        $region53: #{tpu_custom_call.1} parent=51 // pred_check
          %p401 = pneg %p156
        $region54: #{tpu_custom_call.1} parent=51 // pred_check_branch
          %403 = sbr.rel (%p401) target = $region56
        $region55: #{tpu_custom_call.1} parent=51 // pred_region
          %s404 = sand.u32 %s141, 1
          %s405 = scalar_lea.sflag [#allocation4], %s404
          %s406 = sand.u32 %s141, 1
          %s407 = smul.addr %s406, 32
          %s408 = scalar_lea.vmem [#allocation5], %s407
          %410 = dma.done %s405, 512
        $region56: #{tpu_custom_call.1} parent=51 // pred_fallthru
          _
      $region52: #{tpu_custom_call.1} parent=5 // pred_fallthru
        _
    $region6: #{tpu_custom_call.1} parent=1 // loop_footer
      %s21 = sadd.s32 1, %s17
    $region7: #{tpu_custom_call.1} parent=1 // loop_footer_branch
      %16 = sbr.rel target = $region3
    $region8: #{tpu_custom_call.1} parent=1 // loop_exit
      _
    %411 = vsyncpa [#allocation3], 1
    %s412 = scalar_lea.sflag [#allocation3], 1
    %413 = vsyncpa %s412, 1
    %414 = vsyncpa [#allocation4], 1
    %s415 = scalar_lea.sflag [#allocation4], 1
    %416 = vsyncpa %s415, 1

</llo_original>
